<compile_context>
chip_gen: v7x
topology: tpu7x:2x2x1
jax: 0.10.0
libtpu: 0.0.40
codegen_flags: <defaults>
</compile_context>

<pallas_src>
import jax
import jax.numpy as jnp
from jax.experimental import pallas as pl
from jax.experimental.pallas import tpu as pltpu


def mlp_kernel(x_ref, w123_ref, b123_ref, wh_ref, bh_ref, o_ref):
    # One batch tile (TB, F) against VMEM-resident fused weights.
    h = jnp.dot(x_ref[...], w123_ref[...],
                preferred_element_type=jnp.float32) + b123_ref[...]
    h = jnp.maximum(h, 0.0)                       # ReLU before the head
    y = jnp.dot(h, wh_ref[...],
                preferred_element_type=jnp.float32) + bh_ref[...]
    o_ref[...] = y.astype(o_ref.dtype)


def fuse_mlp_params(params):
    """One-time prepare step: fold fc1->fc2->fc3 (no activation between them)
    into a single linear layer.  Call once and reuse across forward calls."""
    w1, b1, w2, b2, w3, b3, wh, bh = params
    w123 = w1 @ w2 @ w3                  # (F, 32)
    b123 = (b1 @ w2 + b2) @ w3 + b3      # (1, 32)
    return w123, b123, wh, bh


def mlp_forward(x, fused_params, *, tb=8192):
    """x: (B, in_features) float32 -> (B, 2) float32.

    fused_params = fuse_mlp_params(params).  Per-call path is only the
    pallas_call: no padding, no weight math."""
    w123, b123, wh, bh = fused_params
    B, F = x.shape
    H = w123.shape[1]                    # 32
    O = wh.shape[1]                      # 2

    # Batch tile: multiple of 8 (or the full batch when B <= tb).  No padding
    # of x — partial last block handled by Pallas (masked edge stores).
    if B <= tb:
        TB = B                           # full array dim -> always legal
    else:
        TB = tb                          # multiple of 8
    grid = (pl.cdiv(B, TB),)

    out = pl.pallas_call(
        mlp_kernel,
        out_shape=jax.ShapeDtypeStruct((B, O), jnp.float32),
        grid=grid,
        in_specs=[
            pl.BlockSpec((TB, F), lambda i: (i, 0)),   # x: streamed, unpadded
            pl.BlockSpec((F, H), lambda i: (0, 0)),    # fused W123: resident
            pl.BlockSpec((1, H), lambda i: (0, 0)),    # fused b123: resident
            pl.BlockSpec((H, O), lambda i: (0, 0)),    # head W: resident
            pl.BlockSpec((1, O), lambda i: (0, 0)),    # head b: resident
        ],
        out_specs=pl.BlockSpec((TB, O), lambda i: (i, 0)),
        compiler_params=pltpu.CompilerParams(
            dimension_semantics=("parallel",)),        # v7x: 2 TCs split batch
    )(x, w123, b123, wh, bh)

    return out


def init_params(key, in_features=75):
    """Deterministic synthetic parameters matching nn.Linear shapes.

    Stored as (in, out) / (1, out) for the x @ W + b convention (equivalent to
    PyTorch's x @ W.T + b with W stored (out, in))."""
    ks = jax.random.split(key, 8)

    def linear(kw, kb, fan_in, fan_out):
        bound = 1.0 / jnp.sqrt(jnp.float32(fan_in))
        w = jax.random.uniform(kw, (fan_in, fan_out), jnp.float32, -bound, bound)
        b = jax.random.uniform(kb, (1, fan_out), jnp.float32, -bound, bound)
        return w, b

    w1, b1 = linear(ks[0], ks[1], in_features, 32)
    w2, b2 = linear(ks[2], ks[3], 32, 32)
    w3, b3 = linear(ks[4], ks[5], 32, 32)
    wh, bh = linear(ks[6], ks[7], 32, 2)
    return (w1, b1, w2, b2, w3, b3, wh, bh)


def mlp_reference(x, params):
    w1, b1, w2, b2, w3, b3, wh, bh = params
    h = x @ w1 + b1
    h = h @ w2 + b2
    h = h @ w3 + b3
    h = jnp.maximum(h, 0.0)
    return h @ wh + bh


if __name__ == "__main__":
    key = jax.random.PRNGKey(0)
    k_x, k_p = jax.random.split(key)

    B, F = 8, 75
    x = jax.random.normal(k_x, (B, F), jnp.float32)
    params = init_params(k_p, in_features=F)

    # One-time prepare step (hoisted out of the per-call path).
    fused = jax.block_until_ready(fuse_mlp_params(params))

    out = mlp_forward(x, fused)
    out = jax.block_until_ready(out)

    ref = mlp_reference(x, params)
    assert out.shape == (B, 2), out.shape
    assert jnp.allclose(out, ref, atol=1e-5, rtol=1e-5), \
        float(jnp.max(jnp.abs(out - ref)))

    # Also exercise a multi-tile / partial-last-block path (B not a multiple
    # of the tile) to validate the no-padding streaming scheme.
    B2 = 3 * 8 + 5
    x2 = jax.random.normal(k_x, (B2, F), jnp.float32)
    out2 = jax.block_until_ready(mlp_forward(x2, fused, tb=16))
    ref2 = mlp_reference(x2, params)
    assert out2.shape == (B2, 2), out2.shape
    assert jnp.allclose(out2, ref2, atol=1e-5, rtol=1e-5), \
        float(jnp.max(jnp.abs(out2 - ref2)))

    print("KERNEL_OK")
</pallas_src>

<mosaic_0001>
module attributes {stable_mosaic.version = 11 : i64} {
  func.func @mlp_kernel(%arg0: i32, %arg1: memref<8x75xf32, #tpu.memory_space<vmem>>, %arg2: memref<75x32xf32, #tpu.memory_space<vmem>>, %arg3: memref<1x32xf32, #tpu.memory_space<vmem>>, %arg4: memref<32x2xf32, #tpu.memory_space<vmem>>, %arg5: memref<1x2xf32, #tpu.memory_space<vmem>>, %arg6: memref<8x2xf32, #tpu.memory_space<vmem>>) attributes {dimension_semantics = [#tpu.dimension_semantics<parallel>], iteration_bounds = array<i64: 1>, scalar_prefetch = 0 : i64, scratch_operands = 0 : i64, tpu.core_type = #tpu.core_type<tc>, window_params = [{transform_indices = @transform_0, window_bounds = array<i64: 8, 75>}, {pipeline_mode = #tpu.pipeline_mode<synchronous>, transform_indices = @transform_1, window_bounds = array<i64: 75, 32>}, {pipeline_mode = #tpu.pipeline_mode<synchronous>, transform_indices = @transform_2, window_bounds = array<i64: 1, 32>}, {pipeline_mode = #tpu.pipeline_mode<synchronous>, transform_indices = @transform_3, window_bounds = array<i64: 32, 2>}, {pipeline_mode = #tpu.pipeline_mode<synchronous>, transform_indices = @transform_4, window_bounds = array<i64: 1, 2>}, {transform_indices = @transform_5, window_bounds = array<i64: 8, 2>}]} {
    %c0 = arith.constant 0 : index
    %c0_0 = arith.constant 0 : index
    %0 = vector.load %arg1[%c0, %c0_0] : memref<8x75xf32, #tpu.memory_space<vmem>>, vector<8x75xf32>
    %c0_1 = arith.constant 0 : index
    %c0_2 = arith.constant 0 : index
    %1 = vector.load %arg2[%c0_1, %c0_2] : memref<75x32xf32, #tpu.memory_space<vmem>>, vector<75x32xf32>
    %cst = arith.constant dense<0.000000e+00> : vector<8x32xf32>
    %2 = tpu.matmul %0, %1, %cst {dimension_numbers = #tpu.dot_dimension_numbers<[1], [0], [0], [1], [0, 0, 1, 1], [], []>} : vector<8x75xf32>, vector<75x32xf32>, vector<8x32xf32> -> vector<8x32xf32>
    %c0_3 = arith.constant 0 : index
    %c0_4 = arith.constant 0 : index
    %3 = vector.load %arg3[%c0_3, %c0_4] : memref<1x32xf32, #tpu.memory_space<vmem>>, vector<1x32xf32>
    %4 = vector.broadcast %3 : vector<1x32xf32> to vector<8x32xf32>
    %5 = arith.addf %2, %4 : vector<8x32xf32>
    %cst_5 = arith.constant 0.000000e+00 : f32
    %6 = vector.broadcast %cst_5 : f32 to vector<8x32xf32>
    %7 = arith.maximumf %5, %6 : vector<8x32xf32>
    %c0_6 = arith.constant 0 : index
    %c0_7 = arith.constant 0 : index
    %8 = vector.load %arg4[%c0_6, %c0_7] : memref<32x2xf32, #tpu.memory_space<vmem>>, vector<32x2xf32>
    %cst_8 = arith.constant dense<0.000000e+00> : vector<8x2xf32>
    %9 = tpu.matmul %7, %8, %cst_8 {dimension_numbers = #tpu.dot_dimension_numbers<[1], [0], [0], [1], [0, 0, 1, 1], [], []>} : vector<8x32xf32>, vector<32x2xf32>, vector<8x2xf32> -> vector<8x2xf32>
    %c0_9 = arith.constant 0 : index
    %c0_10 = arith.constant 0 : index
    %10 = vector.load %arg5[%c0_9, %c0_10] : memref<1x2xf32, #tpu.memory_space<vmem>>, vector<1x2xf32>
    %11 = vector.broadcast %10 : vector<1x2xf32> to vector<8x2xf32>
    %12 = arith.addf %9, %11 : vector<8x2xf32>
    %c0_11 = arith.constant 0 : index
    %c0_12 = arith.constant 0 : index
    %13 = vector.load %arg6[%c0_11, %c0_12] : memref<8x2xf32, #tpu.memory_space<vmem>>, vector<8x2xf32>
    tpu.vector_store %arg6[%c0_11, %c0_12], %12 {strides = array<i32>} : memref<8x2xf32, #tpu.memory_space<vmem>>, vector<8x2xf32>,
    return
  }
  func.func @transform_0(%arg0: i32) -> (i32, i32) {
    %c0_i32 = arith.constant 0 : i32
    %c0_i32_0 = arith.constant 0 : i32
    return %arg0, %c0_i32 : i32, i32
  }
  func.func @transform_1(%arg0: i32) -> (i32, i32) {
    %c0_i32 = arith.constant 0 : i32
    %c0_i32_0 = arith.constant 0 : i32
    %c0_i32_1 = arith.constant 0 : i32
    return %c0_i32, %c0_i32_0 : i32, i32
  }
  func.func @transform_2(%arg0: i32) -> (i32, i32) {
    %c0_i32 = arith.constant 0 : i32
    %c0_i32_0 = arith.constant 0 : i32
    %c0_i32_1 = arith.constant 0 : i32
    return %c0_i32, %c0_i32_0 : i32, i32
  }
  func.func @transform_3(%arg0: i32) -> (i32, i32) {
    %c0_i32 = arith.constant 0 : i32
    %c0_i32_0 = arith.constant 0 : i32
    %c0_i32_1 = arith.constant 0 : i32
    return %c0_i32, %c0_i32_0 : i32, i32
  }
  func.func @transform_4(%arg0: i32) -> (i32, i32) {
    %c0_i32 = arith.constant 0 : i32
    %c0_i32_0 = arith.constant 0 : i32
    %c0_i32_1 = arith.constant 0 : i32
    return %c0_i32, %c0_i32_0 : i32, i32
  }
  func.func @transform_5(%arg0: i32) -> (i32, i32) {
    %c0_i32 = arith.constant 0 : i32
    %c0_i32_0 = arith.constant 0 : i32
    return %arg0, %c0_i32 : i32, i32
  }
}

</mosaic_0001>

<llo_original>
// kernel: tpu_custom_call.1
$region0: #{tpu_custom_call.1}
  #allocation0 [shape = 'u32[]', space=smem, size = 0x4, offset = 0x4, fixed_abs, tag = 'smem constant byte address 0x4 - core index']
  #allocation1 [shape = 'u32[144,128]{1,0:T(1,128)}', space=vmem, size = 0x12000, scoped, tag = 'internal scratch']
  %s0 = inlined_call_operand.vmem [shape: f32[8,75], index: 0, kind: input, shape index: {}]
  %s1 = inlined_call_operand.vmem [shape: f32[75,32], index: 1, kind: input, shape index: {}]
  %s2 = inlined_call_operand.vmem [shape: f32[1,32], index: 2, kind: input, shape index: {}]
  %s3 = inlined_call_operand.vmem [shape: f32[32,2], index: 3, kind: input, shape index: {}]
  %s4 = inlined_call_operand.vmem [shape: f32[1,2], index: 4, kind: input, shape index: {}]
  %s5 = inlined_call_operand.vmem [shape: f32[8,2], index: 5, kind: output, shape index: {}]
  %s6 = sld [smem:[#allocation0]]
  $region30: #{tpu_custom_call.1} parent=0
    _
  %s8 = ssub.s32 1, %s6
  %s9 = scalar_select 0, %s8, %s6
  // Predicated region
  $region2: #{tpu_custom_call.1} parent=0 // pred_check
    _
  $region3: #{tpu_custom_call.1} parent=0 // pred_check_branch
    %11 = sbr.rel (0) target = $region5
  $region4: #{tpu_custom_call.1} parent=0 // pred_region
    _
  $region5: #{tpu_custom_call.1} parent=0 // pred_fallthru
    _
  // Predicated region
  $region6: #{tpu_custom_call.1} parent=0 // pred_check
    _
  $region7: #{tpu_custom_call.1} parent=0 // pred_check_branch
    %13 = sbr.rel (0) target = $region9
  $region8: #{tpu_custom_call.1} parent=0 // pred_region
    _
  $region9: #{tpu_custom_call.1} parent=0 // pred_fallthru
    _
  // Predicated region
  $region10: #{tpu_custom_call.1} parent=0 // pred_check
    _
  $region11: #{tpu_custom_call.1} parent=0 // pred_check_branch
    %15 = sbr.rel (0) target = $region13
  $region12: #{tpu_custom_call.1} parent=0 // pred_region
    _
  $region13: #{tpu_custom_call.1} parent=0 // pred_fallthru
    _
  // Predicated region
  $region14: #{tpu_custom_call.1} parent=0 // pred_check
    _
  $region15: #{tpu_custom_call.1} parent=0 // pred_check_branch
    %17 = sbr.rel (0) target = $region17
  $region16: #{tpu_custom_call.1} parent=0 // pred_region
    _
  $region17: #{tpu_custom_call.1} parent=0 // pred_fallthru
    _
  // Predicated region
  $region18: #{tpu_custom_call.1} parent=0 // pred_check
    _
  $region19: #{tpu_custom_call.1} parent=0 // pred_check_branch
    %19 = sbr.rel (0) target = $region21
  $region20: #{tpu_custom_call.1} parent=0 // pred_region
    _
  $region21: #{tpu_custom_call.1} parent=0 // pred_fallthru
    _
  %v20 = vld [vmem:[%s0] sm:$0xff]
  %v21 = vld [vmem:[%s1] sm:$0xff]
  %v22 = vld [vmem:[%s1 + $0x8] sm:$0xff]
  %v23 = vld [vmem:[%s1 + $0x10] sm:$0xff]
  %v24 = vld [vmem:[%s1 + $0x18] sm:$0xff]
  %v25 = vld [vmem:[%s1 + $0x20] sm:$0xff]
  %v26 = vld [vmem:[%s1 + $0x28] sm:$0xff]
  %v27 = vld [vmem:[%s1 + $0x30] sm:$0xff]
  %v28 = vld [vmem:[%s1 + $0x38] sm:$0xff]
  %v29 = vld [vmem:[%s1 + $0x40] sm:$0xff]
  %v30 = vld [vmem:[%s1 + $0x48] sm:$0x7]
  %v31 = vld [vmem:[%s2] sm:$0x1]
  %v33 = vlaneseq
  %v34 = vshrl.u32 %v33, 7
  %v35 = vsub.s32 0, %v34
  %v36 = vrot.slane %v31, %v35
  %vm38 = vcmask 613376
  %v40 = vsel %vm38, %v20, 0
  %vm42 = vcmask 1042432
  %v44 = vsel %vm42, %v30, 0
  %46 = vmatprep.subr.mxu0 0.0
  %47 = vmatpush1.msra.mxu0 %v21
  %48 = vmatprep.subr.mxu0 0.0
  %49 = vmatpush1.msra.mxu0 %v22
  %50 = vmatprep.subr.mxu0 0.0
  %51 = vmatpush1.msra.mxu0 %v23
  %52 = vmatprep.subr.mxu0 0.0
  %53 = vmatpush1.msra.mxu0 %v24
  %54 = vmatprep.subr.mxu0 0.0
  %55 = vmatpush1.msra.mxu0 %v25
  %56 = vmatprep.subr.mxu0 0.0
  %57 = vmatpush1.msra.mxu0 %v26
  %58 = vmatprep.subr.mxu0 0.0
  %59 = vmatpush1.msra.mxu0 %v27
  %60 = vmatprep.subr.mxu0 0.0
  %61 = vmatpush1.msra.mxu0 %v28
  %62 = vmatprep.subr.mxu0 0.0
  %63 = vmatpush1.msra.mxu0 %v29
  %64 = vmatprep.subr.mxu0 0.0
  %65 = vmatpush1.msra.mxu0 %v44
  %66 = vmatprep.subr.mxu0 0.0
  %67 = vmatpush1.msra.mxu0 0.0
  %68 = vmatprep.subr.mxu0 0.0
  %69 = vmatpush1.msra.mxu0 0.0
  %70 = vmatprep.subr.mxu0 0.0
  %71 = vmatpush1.msra.mxu0 0.0
  %72 = vmatprep.subr.mxu0 0.0
  %73 = vmatpush1.msra.mxu0 0.0
  %74 = vmatprep.subr.mxu0 0.0
  %75 = vmatpush1.msra.mxu0 0.0
  %76 = vmatprep.subr.mxu0 0.0
  %77 = vmatpush1.msra.mxu0 0.0
  %78 = vmatprep.subr.mxu0 0.0
  %79 = vmatpush1.msra.mxu0 0.0
  %80 = vmatprep.subr.mxu0 0.0
  %81 = vmatpush1.msra.mxu0 0.0
  %82 = vmatprep.subr.mxu0 0.0
  %83 = vmatpush1.msra.mxu0 0.0
  %84 = vmatprep.subr.mxu0 0.0
  %85 = vmatpush1.msra.mxu0 0.0
  %86 = vmatprep.subr.mxu0 0.0
  %87 = vmatpush1.msra.mxu0 0.0
  %88 = vmatprep.subr.mxu0 0.0
  %89 = vmatpush1.msra.mxu0 0.0
  %90 = vmatprep.subr.mxu0 0.0
  %91 = vmatpush1.msra.mxu0 0.0
  %92 = vmatprep.subr.mxu0 0.0
  %93 = vmatpush1.msra.mxu0 0.0
  %94 = vmatprep.subr.mxu0 0.0
  %95 = vmatpush1.msra.mxu0 0.0
  %96 = vmatprep.subr.mxu0 0.0
  %97 = vmatpush1.msra.mxu0 0.0
  %98 = vmatprep.subr.mxu0 0.0
  %99 = vmatpush1.msra.mxu0 0.0
  %100 = vmatprep.subr.mxu0 0.0
  %101 = vmatpush1.msra.mxu0 0.0
  %102 = vmatprep.subr.mxu0 0.0
  %103 = vmatpush1.msra.mxu0 0.0
  %104 = vmatprep.subr.mxu0 0.0
  %105 = vmatpush1.msra.mxu0 0.0
  %106 = vmatprep.subr.mxu0 0.0
  %107 = vmatpush1.msra.mxu0 0.0
  %108 = vmatprep.subr.mxu0 0.0
  %109 = vmatpush1.msra.mxu0 0.0
  %110 = vmatprep.mubr.f32.mxu0 0.0
  %111 = vmatmul.mubr.f32.gmra.mrb[0].mxu0 %v40
  %v112 = vpop.f32.mrb[0].mxu0
  %v113 = vadd.f32 %v36, %v112
  %v114 = vpop.f32.mrb[0].mxu0
  %115 = vdwg.mxu0
  %v116 = vmax.f32 %v113, 0.0
  %v117 = vld [vmem:[%s3] sm:$0xff]
  %v118 = vld [vmem:[%s3 + $0x8] sm:$0xff]
  %v119 = vld [vmem:[%s3 + $0x10] sm:$0xff]
  %v120 = vld [vmem:[%s3 + $0x18] sm:$0xff]
  %v121 = vld [vmem:[%s4] sm:$0x1]
  %v123 = vlaneseq
  %v124 = vshrl.u32 %v123, 7
  %v125 = vsub.s32 0, %v124
  %v126 = vrot.slane %v121, %v125
  %vm128 = vcmask 261120
  %v130 = vsel %vm128, %v116, 0
  %132 = vmatprep.subr.mxu0 0.0
  %133 = vmatpush1.msra.mxu0 %v117
  %134 = vmatprep.subr.mxu0 0.0
  %135 = vmatpush1.msra.mxu0 %v118
  %136 = vmatprep.subr.mxu0 0.0
  %137 = vmatpush1.msra.mxu0 %v119
  %138 = vmatprep.subr.mxu0 0.0
  %139 = vmatpush1.msra.mxu0 %v120
  %140 = vmatprep.subr.mxu0 0.0
  %141 = vmatpush1.msra.mxu0 0.0
  %142 = vmatprep.subr.mxu0 0.0
  %143 = vmatpush1.msra.mxu0 0.0
  %144 = vmatprep.subr.mxu0 0.0
  %145 = vmatpush1.msra.mxu0 0.0
  %146 = vmatprep.subr.mxu0 0.0
  %147 = vmatpush1.msra.mxu0 0.0
  %148 = vmatprep.subr.mxu0 0.0
  %149 = vmatpush1.msra.mxu0 0.0
  %150 = vmatprep.subr.mxu0 0.0
  %151 = vmatpush1.msra.mxu0 0.0
  %152 = vmatprep.subr.mxu0 0.0
  %153 = vmatpush1.msra.mxu0 0.0
  %154 = vmatprep.subr.mxu0 0.0
  %155 = vmatpush1.msra.mxu0 0.0
  %156 = vmatprep.subr.mxu0 0.0
  %157 = vmatpush1.msra.mxu0 0.0
  %158 = vmatprep.subr.mxu0 0.0
  %159 = vmatpush1.msra.mxu0 0.0
  %160 = vmatprep.subr.mxu0 0.0
  %161 = vmatpush1.msra.mxu0 0.0
  %162 = vmatprep.subr.mxu0 0.0
  %163 = vmatpush1.msra.mxu0 0.0
  %164 = vmatprep.subr.mxu0 0.0
  %165 = vmatpush1.msra.mxu0 0.0
  %166 = vmatprep.subr.mxu0 0.0
  %167 = vmatpush1.msra.mxu0 0.0
  %168 = vmatprep.subr.mxu0 0.0
  %169 = vmatpush1.msra.mxu0 0.0
  %170 = vmatprep.subr.mxu0 0.0
  %171 = vmatpush1.msra.mxu0 0.0
  %172 = vmatprep.subr.mxu0 0.0
  %173 = vmatpush1.msra.mxu0 0.0
  %174 = vmatprep.subr.mxu0 0.0
  %175 = vmatpush1.msra.mxu0 0.0
  %176 = vmatprep.subr.mxu0 0.0
  %177 = vmatpush1.msra.mxu0 0.0
  %178 = vmatprep.subr.mxu0 0.0
  %179 = vmatpush1.msra.mxu0 0.0
  %180 = vmatprep.subr.mxu0 0.0
  %181 = vmatpush1.msra.mxu0 0.0
  %182 = vmatprep.subr.mxu0 0.0
  %183 = vmatpush1.msra.mxu0 0.0
  %184 = vmatprep.subr.mxu0 0.0
  %185 = vmatpush1.msra.mxu0 0.0
  %186 = vmatprep.subr.mxu0 0.0
  %187 = vmatpush1.msra.mxu0 0.0
  %188 = vmatprep.subr.mxu0 0.0
  %189 = vmatpush1.msra.mxu0 0.0
  %190 = vmatprep.subr.mxu0 0.0
  %191 = vmatpush1.msra.mxu0 0.0
  %192 = vmatprep.subr.mxu0 0.0
  %193 = vmatpush1.msra.mxu0 0.0
  %194 = vmatprep.subr.mxu0 0.0
  %195 = vmatpush1.msra.mxu0 0.0
  %196 = vmatprep.mubr.f32.mxu0 0.0
  %197 = vmatmul.mubr.f32.gmra.mrb[0].mxu0 %v130
  %v198 = vpop.f32.mrb[0].mxu0
  %v199 = vadd.f32 %v126, %v198
  %v200 = vpop.f32.mrb[0].mxu0
  %201 = vdwg.mxu0
  %vm202 = vcmask 15360
  %203 = vst.msk [vmem:[%s5] sm:$0xff] %vm202, %v199
  // Predicated region
  $region22: #{tpu_custom_call.1} parent=0 // pred_check
    _
  $region23: #{tpu_custom_call.1} parent=0 // pred_check_branch
    %205 = sbr.rel (0) target = $region25
  $region24: #{tpu_custom_call.1} parent=0 // pred_region
    _
  $region25: #{tpu_custom_call.1} parent=0 // pred_fallthru
    _
  // Predicated region
  $region26: #{tpu_custom_call.1} parent=0 // pred_check
    _
  $region27: #{tpu_custom_call.1} parent=0 // pred_check_branch
    %207 = sbr.rel (0) target = $region29
  $region28: #{tpu_custom_call.1} parent=0 // pred_region
    _
  $region29: #{tpu_custom_call.1} parent=0 // pred_fallthru
    _

</llo_original>
